<compile_context>
chip_gen: v6e
topology: v6e:2x2x1
jax: 0.10.0
libtpu: 0.0.40
codegen_flags: <defaults>
</compile_context>

<pallas_src>
import jax
import jax.numpy as jnp
from jax.experimental import pallas as pl
from jax.experimental.pallas import tpu as pltpu

_EPS = 1e-5
_LANE = 128

_PARALLEL = pltpu.CompilerParams(dimension_semantics=("parallel",))


# ---------------------------------------------------------------------------
# small helpers
# ---------------------------------------------------------------------------
def _round_up(x, m):
    return ((x + m - 1) // m) * m


def _pick_tile_m(m):
    """Largest row tile (multiple of 8) from the preferred list that divides m."""
    for t in (512, 256, 128, 64, 32, 16, 8):
        if m % t == 0:
            return t
    return m


def _pad_axis(a, axis, target):
    pad = target - a.shape[axis]
    if pad == 0:
        return a
    widths = [(0, 0)] * a.ndim
    widths[axis] = (0, pad)
    return jnp.pad(a, widths)


def _bn_fold(stats, count, gamma, beta):
    """Fold training-mode BatchNorm into per-channel (scale, bias).

    stats: (num_tiles, 2, C) partial [sum, sum_sq] -> global biased mean/var.
    """
    total = jnp.sum(stats, axis=0)                       # (2, C)
    mean = total[0:1] / count
    var = jnp.maximum(total[1:2] / count - mean * mean, 0.0)  # guard cancellation
    scale = gamma * jax.lax.rsqrt(var + _EPS)
    bias = beta - mean * scale
    return scale, bias


# ---------------------------------------------------------------------------
# Pallas kernels
# ---------------------------------------------------------------------------
def _conv1x1_stats_kernel(x_ref, w_ref, y_ref, stats_ref):
    """y = x @ w (bf16 MXU, f32 accumulate); emit per-tile sum / sum-of-squares."""
    y = jnp.dot(x_ref[...], w_ref[...], preferred_element_type=jnp.float32)
    y_ref[...] = y
    stats_ref[0, 0:1, :] = jnp.sum(y, axis=0, keepdims=True)
    stats_ref[0, 1:2, :] = jnp.sum(y * y, axis=0, keepdims=True)


def _bn_relu_conv1x1_stats_kernel(y_in_ref, scale_ref, bias_ref, w_ref, y_ref,
                                  stats_ref):
    """y = relu(y_in*scale + bias) @ w ; previous stage's BN+ReLU is folded in."""
    h = jnp.maximum(y_in_ref[...] * scale_ref[...] + bias_ref[...], 0.0)
    y = jnp.dot(h.astype(jnp.bfloat16), w_ref[...],
                preferred_element_type=jnp.float32)
    y_ref[...] = y
    stats_ref[0, 0:1, :] = jnp.sum(y, axis=0, keepdims=True)
    stats_ref[0, 1:2, :] = jnp.sum(y * y, axis=0, keepdims=True)


def _bn_add_relu_kernel(y_ref, scale_ref, bias_ref, res_ref, o_ref):
    """out = relu(y*scale + bias + residual)."""
    o_ref[...] = jnp.maximum(
        y_ref[...] * scale_ref[...] + bias_ref[...] + res_ref[...], 0.0)


def _make_conv3x3_fused_kernel(H, W, C, PW):
    """3x3 conv over one image with BN1+ReLU folded in.

    The zero-padded halo block lives only in a VMEM scratch (the interior is
    written at a sublane-aligned column offset PW); the 9 taps are read back as
    shifted slices and fed to the MXU as bf16 with f32 accumulation.  This
    removes the 9x-expanded HBM im2col of the naive formulation.
    """
    def kernel(y1_ref, scale_ref, bias_ref, w_ref, y2_ref, stats_ref, hp_ref):
        scale = scale_ref[...].reshape(1, 1, C)
        bias = bias_ref[...].reshape(1, 1, C)
        h = jnp.maximum(y1_ref[0] * scale + bias, 0.0)         # BN1 + ReLU
        hp_ref[...] = jnp.zeros(hp_ref.shape, hp_ref.dtype)    # zero halo border
        hp_ref[1:H + 1, PW:PW + W, :] = h                      # aligned interior
        acc = jnp.zeros((H * W, C), jnp.float32)
        for k in range(9):                                     # unrolled 9 taps
            ky, kx = divmod(k, 3)
            tap = hp_ref[ky:ky + H, PW - 1 + kx:PW - 1 + kx + W, :]
            acc = acc + jnp.dot(tap.astype(jnp.bfloat16).reshape(H * W, C),
                                w_ref[k], preferred_element_type=jnp.float32)
        y2_ref[0] = acc
        stats_ref[0, 0:1, :] = jnp.sum(acc, axis=0, keepdims=True)
        stats_ref[0, 1:2, :] = jnp.sum(acc * acc, axis=0, keepdims=True)
    return kernel


# ---------------------------------------------------------------------------
# pallas_call wrappers (tiled, pipelined)
# ---------------------------------------------------------------------------
def _conv1x1_stats(x2d, w, tile_m):
    M, K = x2d.shape
    C = w.shape[1]
    nt = M // tile_m
    return pl.pallas_call(
        _conv1x1_stats_kernel,
        grid=(nt,),
        in_specs=[
            pl.BlockSpec((tile_m, K), lambda i: (i, 0)),
            pl.BlockSpec((K, C), lambda i: (0, 0)),
        ],
        out_specs=[
            pl.BlockSpec((tile_m, C), lambda i: (i, 0)),
            pl.BlockSpec((1, 2, C), lambda i: (i, 0, 0)),
        ],
        out_shape=[
            jax.ShapeDtypeStruct((M, C), jnp.float32),
            jax.ShapeDtypeStruct((nt, 2, C), jnp.float32),
        ],
        compiler_params=_PARALLEL,
        cost_estimate=pl.CostEstimate(
            flops=2 * M * K * C, transcendentals=0,
            bytes_accessed=M * K * 2 + K * C * 2 + M * C * 4 + nt * 2 * C * 4),
    )(x2d, w)


def _bn_relu_conv1x1_stats(y_in, scale, bias, w, tile_m):
    M, K = y_in.shape
    C = w.shape[1]
    nt = M // tile_m
    return pl.pallas_call(
        _bn_relu_conv1x1_stats_kernel,
        grid=(nt,),
        in_specs=[
            pl.BlockSpec((tile_m, K), lambda i: (i, 0)),
            pl.BlockSpec((1, K), lambda i: (0, 0)),
            pl.BlockSpec((1, K), lambda i: (0, 0)),
            pl.BlockSpec((K, C), lambda i: (0, 0)),
        ],
        out_specs=[
            pl.BlockSpec((tile_m, C), lambda i: (i, 0)),
            pl.BlockSpec((1, 2, C), lambda i: (i, 0, 0)),
        ],
        out_shape=[
            jax.ShapeDtypeStruct((M, C), jnp.float32),
            jax.ShapeDtypeStruct((nt, 2, C), jnp.float32),
        ],
        compiler_params=_PARALLEL,
        cost_estimate=pl.CostEstimate(
            flops=2 * M * K * C, transcendentals=0,
            bytes_accessed=M * K * 4 + K * C * 2 + M * C * 4 + nt * 2 * C * 4),
    )(y_in, scale, bias, w)


def _conv3x3_fused(y1_img, scale, bias, w9):
    N, H, W, C = y1_img.shape
    PW = 8  # sublane-aligned left pad of the halo scratch
    kernel = _make_conv3x3_fused_kernel(H, W, C, PW)
    return pl.pallas_call(
        kernel,
        grid=(N,),
        in_specs=[
            pl.BlockSpec((1, H, W, C), lambda n: (n, 0, 0, 0)),
            pl.BlockSpec((1, C), lambda n: (0, 0)),
            pl.BlockSpec((1, C), lambda n: (0, 0)),
            pl.BlockSpec((9, C, C), lambda n: (0, 0, 0)),
        ],
        out_specs=[
            pl.BlockSpec((1, H * W, C), lambda n: (n, 0, 0)),
            pl.BlockSpec((1, 2, C), lambda n: (n, 0, 0)),
        ],
        out_shape=[
            jax.ShapeDtypeStruct((N, H * W, C), jnp.float32),
            jax.ShapeDtypeStruct((N, 2, C), jnp.float32),
        ],
        scratch_shapes=[pltpu.VMEM((H + 2, W + 2 * PW, C), jnp.float32)],
        compiler_params=_PARALLEL,
        cost_estimate=pl.CostEstimate(
            flops=2 * 9 * N * H * W * C * C, transcendentals=0,
            bytes_accessed=2 * N * H * W * C * 4 + 9 * C * C * 2 + N * 2 * C * 4),
    )(y1_img, scale, bias, w9)


def _bn_add_relu(y, scale, bias, res, tile_m):
    M, C = y.shape
    nt = M // tile_m
    return pl.pallas_call(
        _bn_add_relu_kernel,
        grid=(nt,),
        in_specs=[
            pl.BlockSpec((tile_m, C), lambda i: (i, 0)),
            pl.BlockSpec((1, C), lambda i: (0, 0)),
            pl.BlockSpec((1, C), lambda i: (0, 0)),
            pl.BlockSpec((tile_m, C), lambda i: (i, 0)),
        ],
        out_specs=pl.BlockSpec((tile_m, C), lambda i: (i, 0)),
        out_shape=jax.ShapeDtypeStruct((M, C), jnp.float32),
        compiler_params=_PARALLEL,
        cost_estimate=pl.CostEstimate(
            flops=3 * M * C, transcendentals=0, bytes_accessed=4 * M * C * 4),
    )(y, scale, bias, res)


# ---------------------------------------------------------------------------
# Parameter init (deterministic, synthetic; matmul layout)
# ---------------------------------------------------------------------------
def init_bottleneck_params(key, inplanes, planes, base_width=64, groups=1):
    width = int(planes * (base_width / 64.0)) * groups
    cout = planes * 4  # expansion = 4
    ks = jax.random.split(key, 9)
    return {
        "w1": 0.1 * jax.random.normal(ks[0], (inplanes, width), jnp.float32),
        "g1": 1.0 + 0.1 * jax.random.normal(ks[1], (1, width), jnp.float32),
        "b1": 0.1 * jax.random.normal(ks[2], (1, width), jnp.float32),
        "w2": 0.1 * jax.random.normal(ks[3], (3, 3, width, width), jnp.float32),
        "g2": 1.0 + 0.1 * jax.random.normal(ks[4], (1, width), jnp.float32),
        "b2": 0.1 * jax.random.normal(ks[5], (1, width), jnp.float32),
        "w3": 0.1 * jax.random.normal(ks[6], (width, cout), jnp.float32),
        "g3": 1.0 + 0.1 * jax.random.normal(ks[7], (1, cout), jnp.float32),
        "b3": 0.1 * jax.random.normal(ks[8], (1, cout), jnp.float32),
    }


# ---------------------------------------------------------------------------
# Forward pass (mirrors Bottleneck.forward with the module defaults)
# ---------------------------------------------------------------------------
def bottleneck_forward(params, x_nchw, depth=None):
    # TODO(synk): stride>1 / downsample / groups>1 / dilation>1 / depth_conv
    #             paths not implemented (disabled by the module defaults used here).
    x = jnp.transpose(x_nchw, (0, 2, 3, 1)).astype(jnp.float32)  # NCHW -> NHWC
    N, H, W, cin = x.shape
    width = params["w1"].shape[1]
    cout = params["w3"].shape[1]
    assert cout == cin, "identity shortcut requires cout == inplanes (no downsample)"

    cin_p = _round_up(cin, _LANE)
    wid_p = _round_up(width, _LANE)
    cout_p = _round_up(cout, _LANE)
    M = N * H * W
    tile_m = _pick_tile_m(M)

    # lane-pad channels so every matmul output / store tile is lane-dense (>=128)
    x2d = _pad_axis(x, 3, cin_p).reshape(M, cin_p)
    w1 = _pad_axis(_pad_axis(params["w1"], 0, cin_p), 1, wid_p).astype(jnp.bfloat16)
    w2 = _pad_axis(_pad_axis(params["w2"], 2, wid_p), 3, wid_p)
    w2 = w2.reshape(9, wid_p, wid_p).astype(jnp.bfloat16)
    w3 = _pad_axis(_pad_axis(params["w3"], 0, wid_p), 1, cout_p).astype(jnp.bfloat16)
    g1, b1 = _pad_axis(params["g1"], 1, wid_p), _pad_axis(params["b1"], 1, wid_p)
    g2, b2 = _pad_axis(params["g2"], 1, wid_p), _pad_axis(params["b2"], 1, wid_p)
    g3, b3 = _pad_axis(params["g3"], 1, cout_p), _pad_axis(params["b3"], 1, cout_p)

    # --- stage 1: conv1 (1x1) + global batch-stat accumulation --------------
    y1, s1 = _conv1x1_stats(x2d.astype(jnp.bfloat16), w1, tile_m)
    scale1, bias1 = _bn_fold(s1, float(M), g1, b1)

    # --- stage 2: BN1+ReLU fused with 3x3 conv (halo kept in VMEM) ----------
    y2, s2 = _conv3x3_fused(y1.reshape(N, H, W, wid_p), scale1, bias1, w2)
    scale2, bias2 = _bn_fold(s2, float(M), g2, b2)

    # --- stage 3: BN2+ReLU fused with conv3 (1x1) ---------------------------
    y3, s3 = _bn_relu_conv1x1_stats(y2.reshape(M, wid_p), scale2, bias2, w3, tile_m)
    scale3, bias3 = _bn_fold(s3, float(M), g3, b3)

    # --- BN3 + identity residual + ReLU --------------------------------------
    out2d = _bn_add_relu(y3, scale3, bias3, x2d, tile_m)
    out = out2d.reshape(N, H, W, cout_p)[..., :cout]
    out = jnp.transpose(out, (0, 3, 1, 2)).astype(x_nchw.dtype)  # back to NCHW
    return out, depth


# ---------------------------------------------------------------------------
# Pure-JAX reference (same math, used for a correctness assertion)
# ---------------------------------------------------------------------------
def _reference_forward(params, x_nchw):
    x = jnp.transpose(x_nchw, (0, 2, 3, 1)).astype(jnp.float32)
    N, H, W, cin = x.shape
    width = params["w1"].shape[1]
    M = N * H * W

    def bn(y, g, b):
        mean = jnp.mean(y, axis=0, keepdims=True)
        var = jnp.mean(jnp.square(y - mean), axis=0, keepdims=True)
        return (y - mean) * jax.lax.rsqrt(var + _EPS) * g + b

    def mm_bf16(a, w):
        return jnp.dot(a.astype(jnp.bfloat16), w.astype(jnp.bfloat16),
                       preferred_element_type=jnp.float32)

    x2d = x.reshape(M, cin)
    y1 = mm_bf16(x2d, params["w1"])
    h1 = jnp.maximum(bn(y1, params["g1"], params["b1"]), 0.0)
    hp = jnp.pad(h1.reshape(N, H, W, width), ((0, 0), (1, 1), (1, 1), (0, 0)))
    y2 = jnp.zeros((M, width), jnp.float32)
    for ky in range(3):
        for kx in range(3):
            tap = hp[:, ky:ky + H, kx:kx + W, :].reshape(M, width)
            y2 = y2 + mm_bf16(tap, params["w2"][ky, kx])
    h2 = jnp.maximum(bn(y2, params["g2"], params["b2"]), 0.0)
    y3 = mm_bf16(h2, params["w3"])
    out = jnp.maximum(bn(y3, params["g3"], params["b3"]) + x2d, 0.0)
    return jnp.transpose(out.reshape(N, H, W, -1), (0, 3, 1, 2))


# ---------------------------------------------------------------------------
if __name__ == "__main__":
    key = jax.random.PRNGKey(0)
    k_x, k_p = jax.random.split(key)

    # Bottleneck(inplanes=16, planes=4): width=4, output channels=16 (=inplanes,
    # so the default identity shortcut is valid with stride=1, downsample=None).
    inplanes, planes = 16, 4
    N, H, W = 2, 32, 32   # M = 2048 -> 4 row tiles of 512; conv2 grid = N = 2

    x = jax.random.normal(k_x, (N, inplanes, H, W), jnp.float32)  # NCHW like PyTorch
    params = init_bottleneck_params(k_p, inplanes, planes)

    out, depth_out = bottleneck_forward(params, x, None)
    out = jax.block_until_ready(out)

    ref = _reference_forward(params, x)

    assert out.shape == (N, planes * 4, H, W), out.shape
    assert depth_out is None
    assert bool(jnp.all(jnp.isfinite(out)))
    assert bool(jnp.all(out >= 0.0))  # final ReLU
    max_err = float(jnp.max(jnp.abs(out - ref)))
    assert max_err < 5e-2, f"mismatch vs reference: {max_err}"

    print("KERNEL_OK")
</pallas_src>

<mosaic_0001>
module attributes {stable_mosaic.version = 11 : i64} {
  func.func @_conv1x1_stats_kernel(%arg0: i32, %arg1: memref<512x128xbf16, #tpu.memory_space<vmem>>, %arg2: memref<128x128xbf16, #tpu.memory_space<vmem>>, %arg3: memref<512x128xf32, #tpu.memory_space<vmem>>, %arg4: memref<1x2x128xf32, #tpu.memory_space<vmem>>) attributes {dimension_semantics = [#tpu.dimension_semantics<parallel>], iteration_bounds = array<i64: 4>, scalar_prefetch = 0 : i64, scratch_operands = 0 : i64, tpu.core_type = #tpu.core_type<tc>, window_params = [{transform_indices = @transform_0, window_bounds = array<i64: 512, 128>}, {pipeline_mode = #tpu.pipeline_mode<synchronous>, transform_indices = @transform_1, window_bounds = array<i64: 128, 128>}, {transform_indices = @transform_2, window_bounds = array<i64: 512, 128>}, {transform_indices = @transform_3, window_bounds = array<i64: 1, 2, 128>}]} {
    %c0 = arith.constant 0 : index
    %c0_0 = arith.constant 0 : index
    %0 = vector.load %arg1[%c0, %c0_0] : memref<512x128xbf16, #tpu.memory_space<vmem>>, vector<512x128xbf16>
    %c0_1 = arith.constant 0 : index
    %c0_2 = arith.constant 0 : index
    %1 = vector.load %arg2[%c0_1, %c0_2] : memref<128x128xbf16, #tpu.memory_space<vmem>>, vector<128x128xbf16>
    %cst = arith.constant dense<0.000000e+00> : vector<512x128xf32>
    %2 = tpu.matmul %0, %1, %cst {dimension_numbers = #tpu.dot_dimension_numbers<[1], [0], [0], [1], [0, 0, 1, 1], [], []>} : vector<512x128xbf16>, vector<128x128xbf16>, vector<512x128xf32> -> vector<512x128xf32>
    %c0_3 = arith.constant 0 : index
    %c0_4 = arith.constant 0 : index
    %3 = vector.load %arg3[%c0_3, %c0_4] : memref<512x128xf32, #tpu.memory_space<vmem>>, vector<512x128xf32>
    tpu.vector_store %arg3[%c0_3, %c0_4], %2 {strides = array<i32>} : memref<512x128xf32, #tpu.memory_space<vmem>>, vector<512x128xf32>,
    %cst_5 = arith.constant dense<0.000000e+00> : vector<128xf32>
    %4 = vector.multi_reduction <add>, %2, %cst_5 [0] : vector<512x128xf32> to vector<128xf32>
    %5 = vector.shape_cast %4 : vector<128xf32> to vector<1x128xf32>
    %c0_6 = arith.constant 0 : index
    %c0_7 = arith.constant 0 : index
    %c0_8 = arith.constant 0 : index
    %6 = vector.load %arg4[%c0_6, %c0_7, %c0_8] : memref<1x2x128xf32, #tpu.memory_space<vmem>>, vector<1x1x128xf32>
    %7 = vector.shape_cast %6 : vector<1x1x128xf32> to vector<1x128xf32>
    %8 = vector.shape_cast %5 : vector<1x128xf32> to vector<1x1x128xf32>
    tpu.vector_store %arg4[%c0_6, %c0_7, %c0_8], %8 {strides = array<i32>} : memref<1x2x128xf32, #tpu.memory_space<vmem>>, vector<1x1x128xf32>,
    %9 = arith.mulf %2, %2 : vector<512x128xf32>
    %cst_9 = arith.constant dense<0.000000e+00> : vector<128xf32>
    %10 = vector.multi_reduction <add>, %9, %cst_9 [0] : vector<512x128xf32> to vector<128xf32>
    %11 = vector.shape_cast %10 : vector<128xf32> to vector<1x128xf32>
    %c0_10 = arith.constant 0 : index
    %c1 = arith.constant 1 : index
    %c0_11 = arith.constant 0 : index
    %12 = vector.load %arg4[%c0_10, %c1, %c0_11] : memref<1x2x128xf32, #tpu.memory_space<vmem>>, vector<1x1x128xf32>
    %13 = vector.shape_cast %12 : vector<1x1x128xf32> to vector<1x128xf32>
    %14 = vector.shape_cast %11 : vector<1x128xf32> to vector<1x1x128xf32>
    tpu.vector_store %arg4[%c0_10, %c1, %c0_11], %14 {strides = array<i32>} : memref<1x2x128xf32, #tpu.memory_space<vmem>>, vector<1x1x128xf32>,
    return
  }
  func.func @transform_0(%arg0: i32) -> (i32, i32) {
    %c0_i32 = arith.constant 0 : i32
    %c0_i32_0 = arith.constant 0 : i32
    return %arg0, %c0_i32 : i32, i32
  }
  func.func @transform_1(%arg0: i32) -> (i32, i32) {
    %c0_i32 = arith.constant 0 : i32
    %c0_i32_0 = arith.constant 0 : i32
    %c0_i32_1 = arith.constant 0 : i32
    return %c0_i32, %c0_i32_0 : i32, i32
  }
  func.func @transform_2(%arg0: i32) -> (i32, i32) {
    %c0_i32 = arith.constant 0 : i32
    %c0_i32_0 = arith.constant 0 : i32
    return %arg0, %c0_i32 : i32, i32
  }
  func.func @transform_3(%arg0: i32) -> (i32, i32, i32) {
    %c0_i32 = arith.constant 0 : i32
    %c0_i32_0 = arith.constant 0 : i32
    %c0_i32_1 = arith.constant 0 : i32
    return %arg0, %c0_i32, %c0_i32_0 : i32, i32, i32
  }
}

</mosaic_0001>

<llo_original>
// kernel: tpu_custom_call.1
$region0: #{tpu_custom_call.1}
  #allocation0 [shape = 'u32[]', space=smem, size = 0x4, offset = 0x4, fixed_abs, tag = 'smem constant byte address 0x4 - core index']
  #allocation1 [shape = 'u32[144,128]{1,0:T(1,128)}', space=vmem, size = 0x12000, scoped, tag = 'internal scratch']
  %s0 = inlined_call_operand.hbm [shape: bf16[2048,128], index: 0, kind: input, shape index: {}]
  %s1 = inlined_call_operand.hbm [shape: bf16[128,128], index: 1, kind: input, shape index: {}]
  %s2 = inlined_call_operand.hbm [shape: f32[2048,128], index: 2, kind: output, shape index: {0}]
  %s3 = inlined_call_operand.hbm [shape: f32[4,2,128], index: 3, kind: output, shape index: {1}]
  %4 = xla_tuple %s2, %s3
  %s5 = sld [smem:[#allocation0]]
  $region57: #{tpu_custom_call.1} parent=0
    _
  %s7 = ssub.s32 1, %s5
  %s8 = scalar_select 0, %s7, %s5
  $region1: #{tpu_custom_call.1} parent=0
    #allocation2 [shape = 'u8[262144]{0}', space=vmem, size = 0x40000, scoped, tag = 'input window, operand 0']
    #allocation3 [shape = 's32[2]{0}', space=sflag, size = 0x8, scoped, tag = 'scoped memory for tpu_custom_call.1']
    #allocation4 [shape = 's32[2]{0}', space=sflag, size = 0x8, scoped, tag = 'scoped memory for tpu_custom_call.1']
    #allocation5 [shape = 'u8[32768]{0}', space=vmem, size = 0x8000, scoped, tag = 'input window, operand 1, single buffered']
    #allocation6 [shape = 's32[1]{0}', space=sflag, size = 0x4, scoped, tag = 'scoped memory for tpu_custom_call.1']
    #allocation7 [shape = 'u8[524288]{0}', space=vmem, size = 0x80000, scoped, tag = 'output window, operand 0']
    #allocation8 [shape = 'u8[2048]{0}', space=vmem, size = 0x800, scoped, tag = 'output window, operand 1']
    #allocation9 [shape = 's32[2]{0}', space=sflag, size = 0x8, scoped, tag = 'scoped memory for tpu_custom_call.1']
    %9 = vsyncpa [#allocation3], 0
    %s10 = scalar_lea.sflag [#allocation3], 1
    %11 = vsyncpa %s10, 0
    %12 = vsyncpa [#allocation6], 0
    %13 = vsyncpa [#allocation4], 0
    %s14 = scalar_lea.sflag [#allocation4], 1
    %15 = vsyncpa %s14, 0
    %16 = vsyncpa [#allocation9], 0
    %s17 = scalar_lea.sflag [#allocation9], 1
    %18 = vsyncpa %s17, 0
    loop: start=0, step=1, limit=6
    $region2: #{tpu_custom_call.1} parent=1 // loop_pre_header
      _
    $region3: #{tpu_custom_call.1} parent=1 // loop_header
      %s20 = sphi 0, %s24
      %p21 = scmp.ge.s32.totalorder %s20, 6
      %s30 = sphi 0, %s32
      %s33 = sphi 0, %s30
      %s34 = sphi 0, %s33
      %s50 = sphi 0, %s34
      %s54 = sphi 0, %s54
      %s56 = sphi 0, %s54
      %s57 = sphi 0, %s56
      %s71 = sphi 0, %s57
      %s77 = sphi 0, %s79
      %s80 = sphi 0, %s77
      %s81 = sphi 0, %s80
      %s97 = sphi 0, %s81
      %s103 = sphi 0, %s105
      %s106 = sphi 0, %s103
      %s107 = sphi 0, %s106
      %s123 = sphi 0, %s107
    $region4: #{tpu_custom_call.1} parent=1 // loop_header_branch
      %23 = sbr.rel (%p21) target = $region8
    $region5: #{tpu_custom_call.1} parent=1 // loop_body
      %s25 = ssub.s32 %s20, 1
      %s26 = ssub.s32 %s20, 2
      %s27 = sadd.s32 %s20, 1
      %s28 = ssub.s32 %s20, %s27
      %p29 = scmp.eq.s32.totalorder %s28, 0
      %s31 = sadd.s32 %s30, 1
      %s32 = scalar_select %p29, %s30, %s31
      %p35 = pneg %p29
      %p36 = scmp.eq.s32.totalorder %s20, 3
      %p37 = por %p35, %p36
      %p38 = scmp.ne.s32.totalorder %s30, %s33
      %p39 = scmp.eq.s32.totalorder %s20, 0
      %p40 = por %p38, %p39
      %p41 = scmp.ne.s32.totalorder %s30, %s33
      %p42 = scmp.eq.s32.totalorder %s25, 3
      %p43 = por %p41, %p42
      %p44 = scmp.ne.s32.totalorder %s33, %s34
      %p45 = scmp.eq.s32.totalorder %s25, 0
      %p46 = por %p44, %p45
      %p47 = scmp.ne.s32.totalorder %s33, %s34
      %p48 = scmp.eq.s32.totalorder %s26, 3
      %p49 = por %p47, %p48
      %p51 = scmp.ne.s32.totalorder %s34, %s50
      %p52 = scmp.eq.s32.totalorder %s26, 0
      %p53 = por %p51, %p52
      %s55 = sadd.s32 %s54, 1
      %p58 = scmp.eq.s32.totalorder %s20, 3
      %p59 = scmp.ne.s32.totalorder %s54, %s56
      %p60 = scmp.eq.s32.totalorder %s20, 0
      %p61 = por %p59, %p60
      %p62 = scmp.ne.s32.totalorder %s54, %s56
      %p63 = scmp.eq.s32.totalorder %s25, 3
      %p64 = por %p62, %p63
      %p65 = scmp.ne.s32.totalorder %s56, %s57
      %p66 = scmp.eq.s32.totalorder %s25, 0
      %p67 = por %p65, %p66
      %p68 = scmp.ne.s32.totalorder %s56, %s57
      %p69 = scmp.eq.s32.totalorder %s26, 3
      %p70 = por %p68, %p69
      %p72 = scmp.ne.s32.totalorder %s57, %s71
      %p73 = scmp.eq.s32.totalorder %s26, 0
      %p74 = por %p72, %p73
      %s75 = ssub.s32 %s20, %s27
      %p76 = scmp.eq.s32.totalorder %s75, 0
      %s78 = sadd.s32 %s77, 1
      %s79 = scalar_select %p76, %s77, %s78
      %p82 = pneg %p76
      %p83 = scmp.eq.s32.totalorder %s20, 3
      %p84 = por %p82, %p83
      %p85 = scmp.ne.s32.totalorder %s77, %s80
      %p86 = scmp.eq.s32.totalorder %s20, 0
      %p87 = por %p85, %p86
      %p88 = scmp.ne.s32.totalorder %s77, %s80
      %p89 = scmp.eq.s32.totalorder %s25, 3
      %p90 = por %p88, %p89
      %p91 = scmp.ne.s32.totalorder %s80, %s81
      %p92 = scmp.eq.s32.totalorder %s25, 0
      %p93 = por %p91, %p92
      %p94 = scmp.ne.s32.totalorder %s80, %s81
      %p95 = scmp.eq.s32.totalorder %s26, 3
      %p96 = por %p94, %p95
      %p98 = scmp.ne.s32.totalorder %s81, %s97
      %p99 = scmp.eq.s32.totalorder %s26, 0
      %p100 = por %p98, %p99
      %s101 = ssub.s32 %s20, %s27
      %p102 = scmp.eq.s32.totalorder %s101, 0
      %s104 = sadd.s32 %s103, 1
      %s105 = scalar_select %p102, %s103, %s104
      %p108 = pneg %p102
      %p109 = scmp.eq.s32.totalorder %s20, 3
      %p110 = por %p108, %p109
      %p111 = scmp.ne.s32.totalorder %s103, %s106
      %p112 = scmp.eq.s32.totalorder %s20, 0
      %p113 = por %p111, %p112
      %p114 = scmp.ne.s32.totalorder %s103, %s106
      %p115 = scmp.eq.s32.totalorder %s25, 3
      %p116 = por %p114, %p115
      %p117 = scmp.ne.s32.totalorder %s106, %s107
      %p118 = scmp.eq.s32.totalorder %s25, 0
      %p119 = por %p117, %p118
      %p120 = scmp.ne.s32.totalorder %s106, %s107
      %p121 = scmp.eq.s32.totalorder %s26, 3
      %p122 = por %p120, %p121
      %p124 = scmp.ne.s32.totalorder %s107, %s123
      %p125 = scmp.eq.s32.totalorder %s26, 0
      %p126 = por %p124, %p125
      %p127 = scmp.le.s32.totalorder 1, %s20
      %p128 = scmp.lt.s32.totalorder %s20, 5
      %p129 = pnand %p127, %p128
      %p130 = pneg %p129
      // Predicated region
      $region9: #{tpu_custom_call.1} parent=5 // pred_check
        _
      $region10: #{tpu_custom_call.1} parent=5 // pred_check_branch
        %132 = sbr.rel (%p129) target = $region12
      $region11: #{tpu_custom_call.1} parent=5 // pred_region
        %s133 = ssub.s32 %s20, 1
        // Predicated region
        $region13: #{tpu_custom_call.1} parent=11 // pred_check
          %p134 = pneg %p67
        $region14: #{tpu_custom_call.1} parent=11 // pred_check_branch
          %136 = sbr.rel (%p134) target = $region16
        $region15: #{tpu_custom_call.1} parent=11 // pred_region
          %s138 = ssub.s32 1024, 1024
          %139 = vsyncadd [#allocation6], %s138
          %s140 = sshll.u32 [#allocation5], 4
          %s141 = int_to_ptr.vmem [resolvable:$true] %s140
          %146 = dma.hbm_to_vmem [thread:$0]  %s1, 1024, %s141, [#allocation6], 64, 64, 4
        $region16: #{tpu_custom_call.1} parent=11 // pred_fallthru
          _
      $region12: #{tpu_custom_call.1} parent=5 // pred_fallthru
        _
      %p147 = scmp.lt.s32.totalorder %s20, 4
      // Predicated region
      $region17: #{tpu_custom_call.1} parent=5 // pred_check
        %p148 = pneg %p147
      $region18: #{tpu_custom_call.1} parent=5 // pred_check_branch
        %150 = sbr.rel (%p148) target = $region20
      $region19: #{tpu_custom_call.1} parent=5 // pred_region
        // Predicated region
        $region21: #{tpu_custom_call.1} parent=19 // pred_check
          %p151 = pneg %p40
        $region22: #{tpu_custom_call.1} parent=19 // pred_check_branch
          %153 = sbr.rel (%p151) target = $region24
        $region23: #{tpu_custom_call.1} parent=19 // pred_region
          %s154 = sand.u32 %s30, 1
          %s155 = scalar_lea.sflag [#allocation3], %s154
          %s156 = sand.u32 %s30, 1
          %s157 = smul.addr %s156, 256
          %s158 = scalar_lea.vmem [#allocation2], %s157
          %s159 = smul.u32 64, %s20
          %s161 = ssub.s32 4096, 4096
          %162 = vsyncadd %s155, %s161
          %s163 = smul.addr %s159, 64
          %s164 = scalar_lea.hbm %s0, %s163
          %s165 = sshll.u32 %s158, 4
          %s166 = int_to_ptr.vmem [resolvable:$true] %s165
          %171 = dma.hbm_to_vmem [thread:$0]  %s164, 4096, %s166, %s155, 64, 64, 4
        $region24: #{tpu_custom_call.1} parent=19 // pred_fallthru
          _
      $region20: #{tpu_custom_call.1} parent=5 // pred_fallthru
        _
      %p172 = scmp.le.s32.totalorder 1, %s20
      %p173 = scmp.lt.s32.totalorder %s20, 5
      %p174 = pnand %p172, %p173
      %p175 = pneg %p174
      // Predicated region
      $region25: #{tpu_custom_call.1} parent=5 // pred_check
        _
      $region26: #{tpu_custom_call.1} parent=5 // pred_check_branch
        %177 = sbr.rel (%p174) target = $region28
      $region27: #{tpu_custom_call.1} parent=5 // pred_region
        %s178 = ssub.s32 %s20, 1
        %s179 = sand.u32 %s33, 1
        %s180 = scalar_lea.sflag [#allocation3], %s179
        %s181 = sand.u32 %s33, 1
        %s182 = smul.addr %s181, 256
        %s183 = scalar_lea.vmem [#allocation2], %s182
        // Predicated region
        $region29: #{tpu_custom_call.1} parent=27 // pred_check
          %p184 = pneg %p46
        $region30: #{tpu_custom_call.1} parent=27 // pred_check_branch
          %186 = sbr.rel (%p184) target = $region32
        $region31: #{tpu_custom_call.1} parent=27 // pred_region
          %187 = dma.done %s180, 4096
        $region32: #{tpu_custom_call.1} parent=27 // pred_fallthru
          _
        // Predicated region
        $region33: #{tpu_custom_call.1} parent=27 // pred_check
          %p188 = pneg %p67
        $region34: #{tpu_custom_call.1} parent=27 // pred_check_branch
          %190 = sbr.rel (%p188) target = $region36
        $region35: #{tpu_custom_call.1} parent=27 // pred_region
          %191 = dma.done [#allocation6], 1024
        $region36: #{tpu_custom_call.1} parent=27 // pred_fallthru
          _
        %s192 = sand.u32 %s33, 1
        %s193 = scalar_lea.sflag [#allocation3], %s192
        %s194 = sand.u32 %s33, 1
        %s195 = smul.addr %s194, 256
        %s196 = scalar_lea.vmem [#allocation2], %s195
        %p197 = pneg %p46
        %p198 = pneg %p43
        %p199 = pneg %p67
        %p200 = pneg %p64
        %p201 = pneg %p93
        %p202 = pneg %p90
        %s203 = sand.u32 %s80, 1
        %s204 = scalar_lea.sflag [#allocation4], %s203
        %s205 = sand.u32 %s80, 1
        %s206 = smul.addr %s205, 512
        %s207 = scalar_lea.vmem [#allocation7], %s206
        %p208 = pneg %p119
        %p209 = pneg %p116
        %s210 = sand.u32 %s106, 1
        %s211 = scalar_lea.sflag [#allocation9], %s210
        %s212 = sand.u32 %s106, 1
        %s213 = smul.addr %s212, 2
        %s214 = scalar_lea.vmem [#allocation8], %s213
        %s215 = smul.u32 64, %s25
        %s216 = smul.u32 64, %s25
        %v218 = vld [vmem:[%s183] sm:$0xf]
        %v219 = vld [vmem:[%s183 + $0x4] sm:$0xf]
        %v220 = vld [vmem:[%s183 + $0x8] sm:$0xf]
        %v221 = vld [vmem:[%s183 + $0xc] sm:$0xf]
        %v222 = vld [vmem:[%s183 + $0x10] sm:$0xf]
        %v223 = vld [vmem:[%s183 + $0x14] sm:$0xf]
        %v224 = vld [vmem:[%s183 + $0x18] sm:$0xf]
        %v225 = vld [vmem:[%s183 + $0x1c] sm:$0xf]
        %v226 = vld [vmem:[%s183 + $0x20] sm:$0xf]
        %v227 = vld [vmem:[%s183 + $0x24] sm:$0xf]
        %v228 = vld [vmem:[%s183 + $0x28] sm:$0xf]
        %v229 = vld [vmem:[%s183 + $0x2c] sm:$0xf]
        %v230 = vld [vmem:[%s183 + $0x30] sm:$0xf]
        %v231 = vld [vmem:[%s183 + $0x34] sm:$0xf]
        %v232 = vld [vmem:[%s183 + $0x38] sm:$0xf]
        %v233 = vld [vmem:[%s183 + $0x3c] sm:$0xf]
        %v234 = vld [vmem:[%s183 + $0x40] sm:$0xf]
        %v235 = vld [vmem:[%s183 + $0x44] sm:$0xf]
        %v236 = vld [vmem:[%s183 + $0x48] sm:$0xf]
        %v237 = vld [vmem:[%s183 + $0x4c] sm:$0xf]
        %v238 = vld [vmem:[%s183 + $0x50] sm:$0xf]
        %v239 = vld [vmem:[%s183 + $0x54] sm:$0xf]
        %v240 = vld [vmem:[%s183 + $0x58] sm:$0xf]
        %v241 = vld [vmem:[%s183 + $0x5c] sm:$0xf]
        %v242 = vld [vmem:[%s183 + $0x60] sm:$0xf]
        %v243 = vld [vmem:[%s183 + $0x64] sm:$0xf]
        %v244 = vld [vmem:[%s183 + $0x68] sm:$0xf]
        %v245 = vld [vmem:[%s183 + $0x6c] sm:$0xf]
        %v246 = vld [vmem:[%s183 + $0x70] sm:$0xf]
        %v247 = vld [vmem:[%s183 + $0x74] sm:$0xf]
        %v248 = vld [vmem:[%s183 + $0x78] sm:$0xf]
        %v249 = vld [vmem:[%s183 + $0x7c] sm:$0xf]
        %v250 = vld [vmem:[%s183 + $0x80] sm:$0xf]
        %v251 = vld [vmem:[%s183 + $0x84] sm:$0xf]
        %v252 = vld [vmem:[%s183 + $0x88] sm:$0xf]
        %v253 = vld [vmem:[%s183 + $0x8c] sm:$0xf]
        %v254 = vld [vmem:[%s183 + $0x90] sm:$0xf]
        %v255 = vld [vmem:[%s183 + $0x94] sm:$0xf]
        %v256 = vld [vmem:[%s183 + $0x98] sm:$0xf]
        %v257 = vld [vmem:[%s183 + $0x9c] sm:$0xf]
        %v258 = vld [vmem:[%s183 + $0xa0] sm:$0xf]
        %v259 = vld [vmem:[%s183 + $0xa4] sm:$0xf]
        %v260 = vld [vmem:[%s183 + $0xa8] sm:$0xf]
        %v261 = vld [vmem:[%s183 + $0xac] sm:$0xf]
        %v262 = vld [vmem:[%s183 + $0xb0] sm:$0xf]
        %v263 = vld [vmem:[%s183 + $0xb4] sm:$0xf]
        %v264 = vld [vmem:[%s183 + $0xb8] sm:$0xf]
        %v265 = vld [vmem:[%s183 + $0xbc] sm:$0xf]
        %v266 = vld [vmem:[%s183 + $0xc0] sm:$0xf]
        %v267 = vld [vmem:[%s183 + $0xc4] sm:$0xf]
        %v268 = vld [vmem:[%s183 + $0xc8] sm:$0xf]
        %v269 = vld [vmem:[%s183 + $0xcc] sm:$0xf]
        %v270 = vld [vmem:[%s183 + $0xd0] sm:$0xf]
        %v271 = vld [vmem:[%s183 + $0xd4] sm:$0xf]
        %v272 = vld [vmem:[%s183 + $0xd8] sm:$0xf]
        %v273 = vld [vmem:[%s183 + $0xdc] sm:$0xf]
        %v274 = vld [vmem:[%s183 + $0xe0] sm:$0xf]
        %v275 = vld [vmem:[%s183 + $0xe4] sm:$0xf]
        %v276 = vld [vmem:[%s183 + $0xe8] sm:$0xf]
        %v277 = vld [vmem:[%s183 + $0xec] sm:$0xf]
        %v278 = vld [vmem:[%s183 + $0xf0] sm:$0xf]
        %v279 = vld [vmem:[%s183 + $0xf4] sm:$0xf]
        %v280 = vld [vmem:[%s183 + $0xf8] sm:$0xf]
        %v281 = vld [vmem:[%s183 + $0xfc] sm:$0xf]
        %v282 = vld [vmem:[#allocation5] sm:$0xf]
        %v283 = vld [vmem:[#allocation5 + $0x4] sm:$0xf]
        %v284 = vld [vmem:[#allocation5 + $0x8] sm:$0xf]
        %v285 = vld [vmem:[#allocation5 + $0xc] sm:$0xf]
        %v286 = vld [vmem:[#allocation5 + $0x10] sm:$0xf]
        %v287 = vld [vmem:[#allocation5 + $0x14] sm:$0xf]
        %v288 = vld [vmem:[#allocation5 + $0x18] sm:$0xf]
        %v289 = vld [vmem:[#allocation5 + $0x1c] sm:$0xf]
        %v290 = vld [vmem:[#allocation5 + $0x20] sm:$0xf]
        %v291 = vld [vmem:[#allocation5 + $0x24] sm:$0xf]
        %v292 = vld [vmem:[#allocation5 + $0x28] sm:$0xf]
        %v293 = vld [vmem:[#allocation5 + $0x2c] sm:$0xf]
        %v294 = vld [vmem:[#allocation5 + $0x30] sm:$0xf]
        %v295 = vld [vmem:[#allocation5 + $0x34] sm:$0xf]
        %v296 = vld [vmem:[#allocation5 + $0x38] sm:$0xf]
        %v297 = vld [vmem:[#allocation5 + $0x3c] sm:$0xf]
        %v362 = vunpack.c.l.b16 %v218
        %v363 = vunpack.c.l.b16 %v219
        %v364 = vunpack.c.l.b16 %v220
        %v365 = vunpack.c.l.b16 %v221
        %v366 = vunpack.c.l.b16 %v222
        %v367 = vunpack.c.l.b16 %v223
        %v368 = vunpack.c.l.b16 %v224
        %v369 = vunpack.c.l.b16 %v225
        %v370 = vunpack.c.l.b16 %v226
        %v371 = vunpack.c.l.b16 %v227
        %v372 = vunpack.c.l.b16 %v228
        %v373 = vunpack.c.l.b16 %v229
        %v374 = vunpack.c.l.b16 %v230
        %v375 = vunpack.c.l.b16 %v231
        %v376 = vunpack.c.l.b16 %v232
        %v377 = vunpack.c.l.b16 %v233
        %v378 = vunpack.c.l.b16 %v234
        %v379 = vunpack.c.l.b16 %v235
        %v380 = vunpack.c.l.b16 %v236
        %v381 = vunpack.c.l.b16 %v237
        %v382 = vunpack.c.l.b16 %v238
        %v383 = vunpack.c.l.b16 %v239
        %v384 = vunpack.c.l.b16 %v240
        %v385 = vunpack.c.l.b16 %v241
        %v386 = vunpack.c.l.b16 %v242
        %v387 = vunpack.c.l.b16 %v243
        %v388 = vunpack.c.l.b16 %v244
        %v389 = vunpack.c.l.b16 %v245
        %v390 = vunpack.c.l.b16 %v246
        %v391 = vunpack.c.l.b16 %v247
        %v392 = vunpack.c.l.b16 %v248
        %v393 = vunpack.c.l.b16 %v249
        %v394 = vunpack.c.l.b16 %v250
        %v395 = vunpack.c.l.b16 %v251
        %v396 = vunpack.c.l.b16 %v252
        %v397 = vunpack.c.l.b16 %v253
        %v398 = vunpack.c.l.b16 %v254
        %v399 = vunpack.c.l.b16 %v255
        %v400 = vunpack.c.l.b16 %v256
        %v401 = vunpack.c.l.b16 %v257
        %v402 = vunpack.c.l.b16 %v258
        %v403 = vunpack.c.l.b16 %v259
        %v404 = vunpack.c.l.b16 %v260
        %v405 = vunpack.c.l.b16 %v261
        %v406 = vunpack.c.l.b16 %v262
        %v407 = vunpack.c.l.b16 %v263
        %v408 = vunpack.c.l.b16 %v264
        %v409 = vunpack.c.l.b16 %v265
        %v410 = vunpack.c.l.b16 %v266
        %v411 = vunpack.c.l.b16 %v267
        %v412 = vunpack.c.l.b16 %v268
        %v413 = vunpack.c.l.b16 %v269
        %v414 = vunpack.c.l.b16 %v270
        %v415 = vunpack.c.l.b16 %v271
        %v416 = vunpack.c.l.b16 %v272
        %v417 = vunpack.c.l.b16 %v273
        %v418 = vunpack.c.l.b16 %v274
        %v419 = vunpack.c.l.b16 %v275
        %v420 = vunpack.c.l.b16 %v276
        %v421 = vunpack.c.l.b16 %v277
        %v422 = vunpack.c.l.b16 %v278
        %v423 = vunpack.c.l.b16 %v279
        %v424 = vunpack.c.l.b16 %v280
        %v425 = vunpack.c.l.b16 %v281
        %v426 = vpack.c.b16 %v363, %v362
        %v427 = vpack.c.b16 %v365, %v364
        %v428 = vpack.c.b16 %v367, %v366
        %v429 = vpack.c.b16 %v369, %v368
        %v430 = vpack.c.b16 %v371, %v370
        %v431 = vpack.c.b16 %v373, %v372
        %v432 = vpack.c.b16 %v375, %v374
        %v433 = vpack.c.b16 %v377, %v376
        %v434 = vpack.c.b16 %v379, %v378
        %v435 = vpack.c.b16 %v381, %v380
        %v436 = vpack.c.b16 %v383, %v382
        %v437 = vpack.c.b16 %v385, %v384
        %v438 = vpack.c.b16 %v387, %v386
        %v439 = vpack.c.b16 %v389, %v388
        %v440 = vpack.c.b16 %v391, %v390
        %v441 = vpack.c.b16 %v393, %v392
        %v442 = vpack.c.b16 %v395, %v394
        %v443 = vpack.c.b16 %v397, %v396
        %v444 = vpack.c.b16 %v399, %v398
        %v445 = vpack.c.b16 %v401, %v400
        %v446 = vpack.c.b16 %v403, %v402
        %v447 = vpack.c.b16 %v405, %v404
        %v448 = vpack.c.b16 %v407, %v406
        %v449 = vpack.c.b16 %v409, %v408
        %v450 = vpack.c.b16 %v411, %v410
        %v451 = vpack.c.b16 %v413, %v412
        %v452 = vpack.c.b16 %v415, %v414
        %v453 = vpack.c.b16 %v417, %v416
        %v454 = vpack.c.b16 %v419, %v418
        %v455 = vpack.c.b16 %v421, %v420
        %v456 = vpack.c.b16 %v423, %v422
        %v457 = vpack.c.b16 %v425, %v424
        %v506 = vunpack.c.l.b16 %v282
        %v507 = vunpack.c.l.b16 %v283
        %v508 = vunpack.c.l.b16 %v284
        %v509 = vunpack.c.l.b16 %v285
        %v510 = vunpack.c.l.b16 %v286
        %v511 = vunpack.c.l.b16 %v287
        %v512 = vunpack.c.l.b16 %v288
        %v513 = vunpack.c.l.b16 %v289
        %v514 = vunpack.c.l.b16 %v290
        %v515 = vunpack.c.l.b16 %v291
        %v516 = vunpack.c.l.b16 %v292
        %v517 = vunpack.c.l.b16 %v293
        %v518 = vunpack.c.l.b16 %v294
        %v519 = vunpack.c.l.b16 %v295
        %v520 = vunpack.c.l.b16 %v296
        %v521 = vunpack.c.l.b16 %v297
        %v522 = vpack.c.b16 %v507, %v506
        %v523 = vpack.c.b16 %v509, %v508
        %v524 = vpack.c.b16 %v511, %v510
        %v525 = vpack.c.b16 %v513, %v512
        %v526 = vpack.c.b16 %v515, %v514
        %v527 = vpack.c.b16 %v517, %v516
        %v528 = vpack.c.b16 %v519, %v518
        %v529 = vpack.c.b16 %v521, %v520
        %538 = vmatprep.subr.bf16.mxu0 0
        %539 = vmatpush1.bf16.msra.mxu0 %v529
        %540 = vmatprep.subr.bf16.mxu0 0
        %541 = vmatpush1.bf16.msra.mxu0 %v528
        %542 = vmatprep.subr.bf16.mxu0 0
        %543 = vmatpush1.bf16.msra.mxu0 %v527
        %544 = vmatprep.subr.bf16.mxu0 0
        %545 = vmatpush1.bf16.msra.mxu0 %v526
        %546 = vmatprep.subr.bf16.mxu0 0
        %547 = vmatpush1.bf16.msra.mxu0 %v525
        %548 = vmatprep.subr.bf16.mxu0 0
        %549 = vmatpush1.bf16.msra.mxu0 %v524
        %550 = vmatprep.subr.bf16.mxu0 0
        %551 = vmatpush1.bf16.msra.mxu0 %v523
        %552 = vmatprep.subr.bf16.mxu0 0
        %553 = vmatpush1.bf16.msra.mxu0 %v522
        %554 = vmatprep.subr.bf16.mxu0 0
        %555 = vmatpush2.bf16.msra.mxu0 0
        %556 = vmatprep.subr.bf16.mxu0 0
        %557 = vmatpush2.bf16.msra.mxu0 0
        %558 = vmatprep.subr.bf16.mxu0 0
        %559 = vmatpush2.bf16.msra.mxu0 0
        %560 = vmatprep.subr.bf16.mxu0 0
        %561 = vmatpush2.bf16.msra.mxu0 0
        %562 = vmatprep.subr.bf16.mxu0 0
        %563 = vmatpush2.bf16.msra.mxu0 0
        %564 = vmatprep.subr.bf16.mxu0 0
        %565 = vmatpush2.bf16.msra.mxu0 0
        %566 = vmatprep.subr.bf16.mxu0 0
        %567 = vmatpush2.bf16.msra.mxu0 0
        %568 = vmatprep.subr.bf16.mxu0 0
        %569 = vmatpush2.bf16.msra.mxu0 0
        %570 = vmatprep.mubr.bf16.mxu0 0
        %571 = vmatmul.mubr.bf16.gmra.mxu0 %v426
        %v572 = vpop.f32.mrf.mxu0
        %v573 = vadd.f32 0.0, %v572
        %v574 = vpop.f32.mrf.mxu0
        %v575 = vpop.f32.mrf.mxu0
        %v576 = vadd.f32 0.0, %v575
        %v577 = vpop.f32.mrf.mxu0
        %578 = vmatprep.mubr.bf16.mxu0 0
        %579 = vmatmul.mubr.bf16.gmra.mxu0 %v427
        %v580 = vpop.f32.mrf.mxu0
        %v581 = vadd.f32 0.0, %v580
        %v582 = vpop.f32.mrf.mxu0
        %v583 = vpop.f32.mrf.mxu0
        %v584 = vadd.f32 0.0, %v583
        %v585 = vpop.f32.mrf.mxu0
        %586 = vmatprep.mubr.bf16.mxu0 0
        %587 = vmatmul.mubr.bf16.gmra.mxu0 %v428
        %v588 = vpop.f32.mrf.mxu0
        %v589 = vadd.f32 0.0, %v588
        %v590 = vpop.f32.mrf.mxu0
        %v591 = vpop.f32.mrf.mxu0
        %v592 = vadd.f32 0.0, %v591
        %v593 = vpop.f32.mrf.mxu0
        %594 = vmatprep.mubr.bf16.mxu0 0
        %595 = vmatmul.mubr.bf16.gmra.mxu0 %v429
        %v596 = vpop.f32.mrf.mxu0
        %v597 = vadd.f32 0.0, %v596
        %v598 = vpop.f32.mrf.mxu0
        %v599 = vpop.f32.mrf.mxu0
        %v600 = vadd.f32 0.0, %v599
        %v601 = vpop.f32.mrf.mxu0
        %602 = vmatprep.mubr.bf16.mxu0 0
        %603 = vmatmul.mubr.bf16.gmra.mxu0 %v430
        %v604 = vpop.f32.mrf.mxu0
        %v605 = vadd.f32 0.0, %v604
        %v606 = vpop.f32.mrf.mxu0
        %v607 = vpop.f32.mrf.mxu0
        %v608 = vadd.f32 0.0, %v607
        %v609 = vpop.f32.mrf.mxu0
        %610 = vmatprep.mubr.bf16.mxu0 0
        %611 = vmatmul.mubr.bf16.gmra.mxu0 %v431
        %v612 = vpop.f32.mrf.mxu0
        %v613 = vadd.f32 0.0, %v612
        %v614 = vpop.f32.mrf.mxu0
        %v615 = vpop.f32.mrf.mxu0
        %v616 = vadd.f32 0.0, %v615
        %v617 = vpop.f32.mrf.mxu0
        %618 = vmatprep.mubr.bf16.mxu0 0
        %619 = vmatmul.mubr.bf16.gmra.mxu0 %v432
        %v620 = vpop.f32.mrf.mxu0
        %v621 = vadd.f32 0.0, %v620
        %v622 = vpop.f32.mrf.mxu0
        %v623 = vpop.f32.mrf.mxu0
        %v624 = vadd.f32 0.0, %v623
        %v625 = vpop.f32.mrf.mxu0
        %626 = vmatprep.mubr.bf16.mxu0 0
        %627 = vmatmul.mubr.bf16.gmra.mxu0 %v433
        %v628 = vpop.f32.mrf.mxu0
        %v629 = vadd.f32 0.0, %v628
        %v630 = vpop.f32.mrf.mxu0
        %v631 = vpop.f32.mrf.mxu0
        %v632 = vadd.f32 0.0, %v631
        %v633 = vpop.f32.mrf.mxu0
        %634 = vmatprep.mubr.bf16.mxu0 0
        %635 = vmatmul.mubr.bf16.gmra.mxu0 %v434
        %v636 = vpop.f32.mrf.mxu0
        %v637 = vadd.f32 0.0, %v636
        %v638 = vpop.f32.mrf.mxu0
        %v639 = vpop.f32.mrf.mxu0
        %v640 = vadd.f32 0.0, %v639
        %v641 = vpop.f32.mrf.mxu0
        %642 = vmatprep.mubr.bf16.mxu0 0
        %643 = vmatmul.mubr.bf16.gmra.mxu0 %v435
        %v644 = vpop.f32.mrf.mxu0
        %v645 = vadd.f32 0.0, %v644
        %v646 = vpop.f32.mrf.mxu0
        %v647 = vpop.f32.mrf.mxu0
        %v648 = vadd.f32 0.0, %v647
        %v649 = vpop.f32.mrf.mxu0
        %650 = vmatprep.mubr.bf16.mxu0 0
        %651 = vmatmul.mubr.bf16.gmra.mxu0 %v436
        %v652 = vpop.f32.mrf.mxu0
        %v653 = vadd.f32 0.0, %v652
        %v654 = vpop.f32.mrf.mxu0
        %v655 = vpop.f32.mrf.mxu0
        %v656 = vadd.f32 0.0, %v655
        %v657 = vpop.f32.mrf.mxu0
        %658 = vmatprep.mubr.bf16.mxu0 0
        %659 = vmatmul.mubr.bf16.gmra.mxu0 %v437
        %v660 = vpop.f32.mrf.mxu0
        %v661 = vadd.f32 0.0, %v660
        %v662 = vpop.f32.mrf.mxu0
        %v663 = vpop.f32.mrf.mxu0
        %v664 = vadd.f32 0.0, %v663
        %v665 = vpop.f32.mrf.mxu0
        %666 = vmatprep.mubr.bf16.mxu0 0
        %667 = vmatmul.mubr.bf16.gmra.mxu0 %v438
        %v668 = vpop.f32.mrf.mxu0
        %v669 = vadd.f32 0.0, %v668
        %v670 = vpop.f32.mrf.mxu0
        %v671 = vpop.f32.mrf.mxu0
        %v672 = vadd.f32 0.0, %v671
        %v673 = vpop.f32.mrf.mxu0
        %674 = vmatprep.mubr.bf16.mxu0 0
        %675 = vmatmul.mubr.bf16.gmra.mxu0 %v439
        %v676 = vpop.f32.mrf.mxu0
        %v677 = vadd.f32 0.0, %v676
        %v678 = vpop.f32.mrf.mxu0
        %v679 = vpop.f32.mrf.mxu0
        %v680 = vadd.f32 0.0, %v679
        %v681 = vpop.f32.mrf.mxu0
        %682 = vmatprep.mubr.bf16.mxu0 0
        %683 = vmatmul.mubr.bf16.gmra.mxu0 %v440
        %v684 = vpop.f32.mrf.mxu0
        %v685 = vadd.f32 0.0, %v684
        %v686 = vpop.f32.mrf.mxu0
        %v687 = vpop.f32.mrf.mxu0
        %v688 = vadd.f32 0.0, %v687
        %v689 = vpop.f32.mrf.mxu0
        %690 = vmatprep.mubr.bf16.mxu0 0
        %691 = vmatmul.mubr.bf16.gmra.mxu0 %v441
        %v692 = vpop.f32.mrf.mxu0
        %v693 = vadd.f32 0.0, %v692
        %v694 = vpop.f32.mrf.mxu0
        %v695 = vpop.f32.mrf.mxu0
        %v696 = vadd.f32 0.0, %v695
        %v697 = vpop.f32.mrf.mxu0
        %698 = vmatprep.mubr.bf16.mxu0 0
        %699 = vmatmul.mubr.bf16.gmra.mxu0 %v442
        %v700 = vpop.f32.mrf.mxu0
        %v701 = vadd.f32 0.0, %v700
        %v702 = vpop.f32.mrf.mxu0
        %v703 = vpop.f32.mrf.mxu0
        %v704 = vadd.f32 0.0, %v703
        %v705 = vpop.f32.mrf.mxu0
        %706 = vmatprep.mubr.bf16.mxu0 0
        %707 = vmatmul.mubr.bf16.gmra.mxu0 %v443
        %v708 = vpop.f32.mrf.mxu0
        %v709 = vadd.f32 0.0, %v708
        %v710 = vpop.f32.mrf.mxu0
        %v711 = vpop.f32.mrf.mxu0
        %v712 = vadd.f32 0.0, %v711
        %v713 = vpop.f32.mrf.mxu0
        %714 = vmatprep.mubr.bf16.mxu0 0
        %715 = vmatmul.mubr.bf16.gmra.mxu0 %v444
        %v716 = vpop.f32.mrf.mxu0
        %v717 = vadd.f32 0.0, %v716
        %v718 = vpop.f32.mrf.mxu0
        %v719 = vpop.f32.mrf.mxu0
        %v720 = vadd.f32 0.0, %v719
        %v721 = vpop.f32.mrf.mxu0
        %722 = vmatprep.mubr.bf16.mxu0 0
        %723 = vmatmul.mubr.bf16.gmra.mxu0 %v445
        %v724 = vpop.f32.mrf.mxu0
        %v725 = vadd.f32 0.0, %v724
        %v726 = vpop.f32.mrf.mxu0
        %v727 = vpop.f32.mrf.mxu0
        %v728 = vadd.f32 0.0, %v727
        %v729 = vpop.f32.mrf.mxu0
        %730 = vmatprep.mubr.bf16.mxu0 0
        %731 = vmatmul.mubr.bf16.gmra.mxu0 %v446
        %v732 = vpop.f32.mrf.mxu0
        %v733 = vadd.f32 0.0, %v732
        %v734 = vpop.f32.mrf.mxu0
        %v735 = vpop.f32.mrf.mxu0
        %v736 = vadd.f32 0.0, %v735
        %v737 = vpop.f32.mrf.mxu0
        %738 = vmatprep.mubr.bf16.mxu0 0
        %739 = vmatmul.mubr.bf16.gmra.mxu0 %v447
        %v740 = vpop.f32.mrf.mxu0
        %v741 = vadd.f32 0.0, %v740
        %v742 = vpop.f32.mrf.mxu0
        %v743 = vpop.f32.mrf.mxu0
        %v744 = vadd.f32 0.0, %v743
        %v745 = vpop.f32.mrf.mxu0
        %746 = vmatprep.mubr.bf16.mxu0 0
        %747 = vmatmul.mubr.bf16.gmra.mxu0 %v448
        %v748 = vpop.f32.mrf.mxu0
        %v749 = vadd.f32 0.0, %v748
        %v750 = vpop.f32.mrf.mxu0
        %v751 = vpop.f32.mrf.mxu0
        %v752 = vadd.f32 0.0, %v751
        %v753 = vpop.f32.mrf.mxu0
        %754 = vmatprep.mubr.bf16.mxu0 0
        %755 = vmatmul.mubr.bf16.gmra.mxu0 %v449
        %v756 = vpop.f32.mrf.mxu0
        %v757 = vadd.f32 0.0, %v756
        %v758 = vpop.f32.mrf.mxu0
        %v759 = vpop.f32.mrf.mxu0
        %v760 = vadd.f32 0.0, %v759
        %v761 = vpop.f32.mrf.mxu0
        %762 = vmatprep.mubr.bf16.mxu0 0
        %763 = vmatmul.mubr.bf16.gmra.mxu0 %v450
        %v764 = vpop.f32.mrf.mxu0
        %v765 = vadd.f32 0.0, %v764
        %v766 = vpop.f32.mrf.mxu0
        %v767 = vpop.f32.mrf.mxu0
        %v768 = vadd.f32 0.0, %v767
        %v769 = vpop.f32.mrf.mxu0
        %770 = vmatprep.mubr.bf16.mxu0 0
        %771 = vmatmul.mubr.bf16.gmra.mxu0 %v451
        %v772 = vpop.f32.mrf.mxu0
        %v773 = vadd.f32 0.0, %v772
        %v774 = vpop.f32.mrf.mxu0
        %v775 = vpop.f32.mrf.mxu0
        %v776 = vadd.f32 0.0, %v775
        %v777 = vpop.f32.mrf.mxu0
        %778 = vmatprep.mubr.bf16.mxu0 0
        %779 = vmatmul.mubr.bf16.gmra.mxu0 %v452
        %v780 = vpop.f32.mrf.mxu0
        %v781 = vadd.f32 0.0, %v780
        %v782 = vpop.f32.mrf.mxu0
        %v783 = vpop.f32.mrf.mxu0
        %v784 = vadd.f32 0.0, %v783
        %v785 = vpop.f32.mrf.mxu0
        %786 = vmatprep.mubr.bf16.mxu0 0
        %787 = vmatmul.mubr.bf16.gmra.mxu0 %v453
        %v788 = vpop.f32.mrf.mxu0
        %v789 = vadd.f32 0.0, %v788
        %v790 = vpop.f32.mrf.mxu0
        %v791 = vpop.f32.mrf.mxu0
        %v792 = vadd.f32 0.0, %v791
        %v793 = vpop.f32.mrf.mxu0
        %794 = vmatprep.mubr.bf16.mxu0 0
        %795 = vmatmul.mubr.bf16.gmra.mxu0 %v454
        %v796 = vpop.f32.mrf.mxu0
        %v797 = vadd.f32 0.0, %v796
        %v798 = vpop.f32.mrf.mxu0
        %v799 = vpop.f32.mrf.mxu0
        %v800 = vadd.f32 0.0, %v799
        %v801 = vpop.f32.mrf.mxu0
        %802 = vmatprep.mubr.bf16.mxu0 0
        %803 = vmatmul.mubr.bf16.gmra.mxu0 %v455
        %v804 = vpop.f32.mrf.mxu0
        %v805 = vadd.f32 0.0, %v804
        %v806 = vpop.f32.mrf.mxu0
        %v807 = vpop.f32.mrf.mxu0
        %v808 = vadd.f32 0.0, %v807
        %v809 = vpop.f32.mrf.mxu0
        %810 = vmatprep.mubr.bf16.mxu0 0
        %811 = vmatmul.mubr.bf16.gmra.mxu0 %v456
        %v812 = vpop.f32.mrf.mxu0
        %v813 = vadd.f32 0.0, %v812
        %v814 = vpop.f32.mrf.mxu0
        %v815 = vpop.f32.mrf.mxu0
        %v816 = vadd.f32 0.0, %v815
        %v817 = vpop.f32.mrf.mxu0
        %818 = vmatprep.mubr.bf16.mxu0 0
        %819 = vmatmul.mubr.bf16.gmra.mxu0 %v457
        %v820 = vpop.f32.mrf.mxu0
        %v821 = vadd.f32 0.0, %v820
        %v822 = vpop.f32.mrf.mxu0
        %v823 = vpop.f32.mrf.mxu0
        %v824 = vadd.f32 0.0, %v823
        %v825 = vpop.f32.mrf.mxu0
        %826 = vdwg.mxu0
        %827 = vst [vmem:[%s207] sm:$0xff] %v573
        %828 = vst [vmem:[%s207 + $0x8] sm:$0xff] %v576
        %829 = vst [vmem:[%s207 + $0x10] sm:$0xff] %v581
        %830 = vst [vmem:[%s207 + $0x18] sm:$0xff] %v584
        %831 = vst [vmem:[%s207 + $0x20] sm:$0xff] %v589
        %832 = vst [vmem:[%s207 + $0x28] sm:$0xff] %v592
        %833 = vst [vmem:[%s207 + $0x30] sm:$0xff] %v597
        %834 = vst [vmem:[%s207 + $0x38] sm:$0xff] %v600
        %835 = vst [vmem:[%s207 + $0x40] sm:$0xff] %v605
        %836 = vst [vmem:[%s207 + $0x48] sm:$0xff] %v608
        %837 = vst [vmem:[%s207 + $0x50] sm:$0xff] %v613
        %838 = vst [vmem:[%s207 + $0x58] sm:$0xff] %v616
        %839 = vst [vmem:[%s207 + $0x60] sm:$0xff] %v621
        %840 = vst [vmem:[%s207 + $0x68] sm:$0xff] %v624
        %841 = vst [vmem:[%s207 + $0x70] sm:$0xff] %v629
        %842 = vst [vmem:[%s207 + $0x78] sm:$0xff] %v632
        %843 = vst [vmem:[%s207 + $0x80] sm:$0xff] %v637
        %844 = vst [vmem:[%s207 + $0x88] sm:$0xff] %v640
        %845 = vst [vmem:[%s207 + $0x90] sm:$0xff] %v645
        %846 = vst [vmem:[%s207 + $0x98] sm:$0xff] %v648
        %847 = vst [vmem:[%s207 + $0xa0] sm:$0xff] %v653
        %848 = vst [vmem:[%s207 + $0xa8] sm:$0xff] %v656
        %849 = vst [vmem:[%s207 + $0xb0] sm:$0xff] %v661
        %850 = vst [vmem:[%s207 + $0xb8] sm:$0xff] %v664
        %851 = vst [vmem:[%s207 + $0xc0] sm:$0xff] %v669
        %852 = vst [vmem:[%s207 + $0xc8] sm:$0xff] %v672
        %853 = vst [vmem:[%s207 + $0xd0] sm:$0xff] %v677
        %854 = vst [vmem:[%s207 + $0xd8] sm:$0xff] %v680
        %855 = vst [vmem:[%s207 + $0xe0] sm:$0xff] %v685
        %856 = vst [vmem:[%s207 + $0xe8] sm:$0xff] %v688
        %857 = vst [vmem:[%s207 + $0xf0] sm:$0xff] %v693
        %858 = vst [vmem:[%s207 + $0xf8] sm:$0xff] %v696
        %859 = vst [vmem:[%s207 + $0x100] sm:$0xff] %v701
        %860 = vst [vmem:[%s207 + $0x108] sm:$0xff] %v704
        %861 = vst [vmem:[%s207 + $0x110] sm:$0xff] %v709
        %862 = vst [vmem:[%s207 + $0x118] sm:$0xff] %v712
        %863 = vst [vmem:[%s207 + $0x120] sm:$0xff] %v717
        %864 = vst [vmem:[%s207 + $0x128] sm:$0xff] %v720
        %865 = vst [vmem:[%s207 + $0x130] sm:$0xff] %v725
        %866 = vst [vmem:[%s207 + $0x138] sm:$0xff] %v728
        %867 = vst [vmem:[%s207 + $0x140] sm:$0xff] %v733
        %868 = vst [vmem:[%s207 + $0x148] sm:$0xff] %v736
        %869 = vst [vmem:[%s207 + $0x150] sm:$0xff] %v741
        %870 = vst [vmem:[%s207 + $0x158] sm:$0xff] %v744
        %871 = vst [vmem:[%s207 + $0x160] sm:$0xff] %v749
        %872 = vst [vmem:[%s207 + $0x168] sm:$0xff] %v752
        %873 = vst [vmem:[%s207 + $0x170] sm:$0xff] %v757
        %874 = vst [vmem:[%s207 + $0x178] sm:$0xff] %v760
        %875 = vst [vmem:[%s207 + $0x180] sm:$0xff] %v765
        %876 = vst [vmem:[%s207 + $0x188] sm:$0xff] %v768
        %877 = vst [vmem:[%s207 + $0x190] sm:$0xff] %v773
        %878 = vst [vmem:[%s207 + $0x198] sm:$0xff] %v776
        %879 = vst [vmem:[%s207 + $0x1a0] sm:$0xff] %v781
        %880 = vst [vmem:[%s207 + $0x1a8] sm:$0xff] %v784
        %881 = vst [vmem:[%s207 + $0x1b0] sm:$0xff] %v789
        %882 = vst [vmem:[%s207 + $0x1b8] sm:$0xff] %v792
        %883 = vst [vmem:[%s207 + $0x1c0] sm:$0xff] %v797
        %884 = vst [vmem:[%s207 + $0x1c8] sm:$0xff] %v800
        %885 = vst [vmem:[%s207 + $0x1d0] sm:$0xff] %v805
        %886 = vst [vmem:[%s207 + $0x1d8] sm:$0xff] %v808
        %887 = vst [vmem:[%s207 + $0x1e0] sm:$0xff] %v813
        %888 = vst [vmem:[%s207 + $0x1e8] sm:$0xff] %v816
        %889 = vst [vmem:[%s207 + $0x1f0] sm:$0xff] %v821
        %890 = vst [vmem:[%s207 + $0x1f8] sm:$0xff] %v824
        %v891 = vadd.f32 %v573, %v576
        %v892 = vadd.f32 %v891, %v581
        %v893 = vadd.f32 %v892, %v584
        %v894 = vadd.f32 %v893, %v589
        %v895 = vadd.f32 %v894, %v592
        %v896 = vadd.f32 %v895, %v597
        %v897 = vadd.f32 %v896, %v600
        %v898 = vadd.f32 %v897, %v605
        %v899 = vadd.f32 %v898, %v608
        %v900 = vadd.f32 %v899, %v613
        %v901 = vadd.f32 %v900, %v616
        %v902 = vadd.f32 %v901, %v621
        %v903 = vadd.f32 %v902, %v624
        %v904 = vadd.f32 %v903, %v629
        %v905 = vadd.f32 %v904, %v632
        %v906 = vadd.f32 %v905, %v637
        %v907 = vadd.f32 %v906, %v640
        %v908 = vadd.f32 %v907, %v645
        %v909 = vadd.f32 %v908, %v648
        %v910 = vadd.f32 %v909, %v653
        %v911 = vadd.f32 %v910, %v656
        %v912 = vadd.f32 %v911, %v661
        %v913 = vadd.f32 %v912, %v664
        %v914 = vadd.f32 %v913, %v669
        %v915 = vadd.f32 %v914, %v672
        %v916 = vadd.f32 %v915, %v677
        %v917 = vadd.f32 %v916, %v680
        %v918 = vadd.f32 %v917, %v685
        %v919 = vadd.f32 %v918, %v688
        %v920 = vadd.f32 %v919, %v693
        %v921 = vadd.f32 %v920, %v696
        %v922 = vadd.f32 %v921, %v701
        %v923 = vadd.f32 %v922, %v704
        %v924 = vadd.f32 %v923, %v709
        %v925 = vadd.f32 %v924, %v712
        %v926 = vadd.f32 %v925, %v717
        %v927 = vadd.f32 %v926, %v720
        %v928 = vadd.f32 %v927, %v725
        %v929 = vadd.f32 %v928, %v728
        %v930 = vadd.f32 %v929, %v733
        %v931 = vadd.f32 %v930, %v736
        %v932 = vadd.f32 %v931, %v741
        %v933 = vadd.f32 %v932, %v744
        %v934 = vadd.f32 %v933, %v749
        %v935 = vadd.f32 %v934, %v752
        %v936 = vadd.f32 %v935, %v757
        %v937 = vadd.f32 %v936, %v760
        %v938 = vadd.f32 %v937, %v765
        %v939 = vadd.f32 %v938, %v768
        %v940 = vadd.f32 %v939, %v773
        %v941 = vadd.f32 %v940, %v776
        %v942 = vadd.f32 %v941, %v781
        %v943 = vadd.f32 %v942, %v784
        %v944 = vadd.f32 %v943, %v789
        %v945 = vadd.f32 %v944, %v792
        %v946 = vadd.f32 %v945, %v797
        %v947 = vadd.f32 %v946, %v800
        %v948 = vadd.f32 %v947, %v805
        %v949 = vadd.f32 %v948, %v808
        %v950 = vadd.f32 %v949, %v813
        %v951 = vadd.f32 %v950, %v816
        %v952 = vadd.f32 %v951, %v821
        %v953 = vadd.f32 %v952, %v824
        %v954 = vrot.slane %v953, 4
        %v955 = vadd.f32 %v953, %v954
        %v956 = vrot.slane %v955, 2
        %v957 = vadd.f32 %v955, %v956
        %v958 = vrot.slane %v957, 1
        %v959 = vadd.f32 %v957, %v958
        %960 = vst [vmem:[%s214] sm:$0x1] %v959
        %v961 = vmul.f32 %v573, %v573
        %v962 = vmul.f32 %v576, %v576
        %v963 = vmul.f32 %v581, %v581
        %v964 = vmul.f32 %v584, %v584
        %v965 = vmul.f32 %v589, %v589
        %v966 = vmul.f32 %v592, %v592
        %v967 = vmul.f32 %v597, %v597
        %v968 = vmul.f32 %v600, %v600
        %v969 = vmul.f32 %v605, %v605
        %v970 = vmul.f32 %v608, %v608
        %v971 = vmul.f32 %v613, %v613
        %v972 = vmul.f32 %v616, %v616
        %v973 = vmul.f32 %v621, %v621
        %v974 = vmul.f32 %v624, %v624
        %v975 = vmul.f32 %v629, %v629
        %v976 = vmul.f32 %v632, %v632
        %v977 = vmul.f32 %v637, %v637
        %v978 = vmul.f32 %v640, %v640
        %v979 = vmul.f32 %v645, %v645
        %v980 = vmul.f32 %v648, %v648
        %v981 = vmul.f32 %v653, %v653
        %v982 = vmul.f32 %v656, %v656
        %v983 = vmul.f32 %v661, %v661
        %v984 = vmul.f32 %v664, %v664
        %v985 = vmul.f32 %v669, %v669
        %v986 = vmul.f32 %v672, %v672
        %v987 = vmul.f32 %v677, %v677
        %v988 = vmul.f32 %v680, %v680
        %v989 = vmul.f32 %v685, %v685
        %v990 = vmul.f32 %v688, %v688
        %v991 = vmul.f32 %v693, %v693
        %v992 = vmul.f32 %v696, %v696
        %v993 = vmul.f32 %v701, %v701
        %v994 = vmul.f32 %v704, %v704
        %v995 = vmul.f32 %v709, %v709
        %v996 = vmul.f32 %v712, %v712
        %v997 = vmul.f32 %v717, %v717
        %v998 = vmul.f32 %v720, %v720
        %v999 = vmul.f32 %v725, %v725
        %v1000 = vmul.f32 %v728, %v728
        %v1001 = vmul.f32 %v733, %v733
        %v1002 = vmul.f32 %v736, %v736
        %v1003 = vmul.f32 %v741, %v741
        %v1004 = vmul.f32 %v744, %v744
        %v1005 = vmul.f32 %v749, %v749
        %v1006 = vmul.f32 %v752, %v752
        %v1007 = vmul.f32 %v757, %v757
        %v1008 = vmul.f32 %v760, %v760
        %v1009 = vmul.f32 %v765, %v765
        %v1010 = vmul.f32 %v768, %v768
        %v1011 = vmul.f32 %v773, %v773
        %v1012 = vmul.f32 %v776, %v776
        %v1013 = vmul.f32 %v781, %v781
        %v1014 = vmul.f32 %v784, %v784
        %v1015 = vmul.f32 %v789, %v789
        %v1016 = vmul.f32 %v792, %v792
        %v1017 = vmul.f32 %v797, %v797
        %v1018 = vmul.f32 %v800, %v800
        %v1019 = vmul.f32 %v805, %v805
        %v1020 = vmul.f32 %v808, %v808
        %v1021 = vmul.f32 %v813, %v813
        %v1022 = vmul.f32 %v816, %v816
        %v1023 = vmul.f32 %v821, %v821
        %v1024 = vmul.f32 %v824, %v824
        %v1025 = vadd.f32 %v961, %v962
        %v1026 = vadd.f32 %v1025, %v963
        %v1027 = vadd.f32 %v1026, %v964
        %v1028 = vadd.f32 %v1027, %v965
        %v1029 = vadd.f32 %v1028, %v966
        %v1030 = vadd.f32 %v1029, %v967
        %v1031 = vadd.f32 %v1030, %v968
        %v1032 = vadd.f32 %v1031, %v969
        %v1033 = vadd.f32 %v1032, %v970
        %v1034 = vadd.f32 %v1033, %v971
        %v1035 = vadd.f32 %v1034, %v972
        %v1036 = vadd.f32 %v1035, %v973
        %v1037 = vadd.f32 %v1036, %v974
        %v1038 = vadd.f32 %v1037, %v975
        %v1039 = vadd.f32 %v1038, %v976
        %v1040 = vadd.f32 %v1039, %v977
        %v1041 = vadd.f32 %v1040, %v978
        %v1042 = vadd.f32 %v1041, %v979
        %v1043 = vadd.f32 %v1042, %v980
        %v1044 = vadd.f32 %v1043, %v981
        %v1045 = vadd.f32 %v1044, %v982
        %v1046 = vadd.f32 %v1045, %v983
        %v1047 = vadd.f32 %v1046, %v984
        %v1048 = vadd.f32 %v1047, %v985
        %v1049 = vadd.f32 %v1048, %v986
        %v1050 = vadd.f32 %v1049, %v987
        %v1051 = vadd.f32 %v1050, %v988
        %v1052 = vadd.f32 %v1051, %v989
        %v1053 = vadd.f32 %v1052, %v990
        %v1054 = vadd.f32 %v1053, %v991
        %v1055 = vadd.f32 %v1054, %v992
        %v1056 = vadd.f32 %v1055, %v993
        %v1057 = vadd.f32 %v1056, %v994
        %v1058 = vadd.f32 %v1057, %v995
        %v1059 = vadd.f32 %v1058, %v996
        %v1060 = vadd.f32 %v1059, %v997
        %v1061 = vadd.f32 %v1060, %v998
        %v1062 = vadd.f32 %v1061, %v999
        %v1063 = vadd.f32 %v1062, %v1000
        %v1064 = vadd.f32 %v1063, %v1001
        %v1065 = vadd.f32 %v1064, %v1002
        %v1066 = vadd.f32 %v1065, %v1003
        %v1067 = vadd.f32 %v1066, %v1004
        %v1068 = vadd.f32 %v1067, %v1005
        %v1069 = vadd.f32 %v1068, %v1006
        %v1070 = vadd.f32 %v1069, %v1007
        %v1071 = vadd.f32 %v1070, %v1008
        %v1072 = vadd.f32 %v1071, %v1009
        %v1073 = vadd.f32 %v1072, %v1010
        %v1074 = vadd.f32 %v1073, %v1011
        %v1075 = vadd.f32 %v1074, %v1012
        %v1076 = vadd.f32 %v1075, %v1013
        %v1077 = vadd.f32 %v1076, %v1014
        %v1078 = vadd.f32 %v1077, %v1015
        %v1079 = vadd.f32 %v1078, %v1016
        %v1080 = vadd.f32 %v1079, %v1017
        %v1081 = vadd.f32 %v1080, %v1018
        %v1082 = vadd.f32 %v1081, %v1019
        %v1083 = vadd.f32 %v1082, %v1020
        %v1084 = vadd.f32 %v1083, %v1021
        %v1085 = vadd.f32 %v1084, %v1022
        %v1086 = vadd.f32 %v1085, %v1023
        %v1087 = vadd.f32 %v1086, %v1024
        %v1088 = vrot.slane %v1087, 4
        %v1089 = vadd.f32 %v1087, %v1088
        %v1090 = vrot.slane %v1089, 2
        %v1091 = vadd.f32 %v1089, %v1090
        %v1092 = vrot.slane %v1091, 1
        %v1093 = vadd.f32 %v1091, %v1092
        %1094 = vst [vmem:[%s214 + $0x1] sm:$0x1] %v1093
        %s1095 = sand.u32 %s80, 1
        %s1096 = scalar_lea.sflag [#allocation4], %s1095
        %s1097 = sand.u32 %s80, 1
        %s1098 = smul.addr %s1097, 512
        %s1099 = scalar_lea.vmem [#allocation7], %s1098
        %s1100 = sand.u32 %s106, 1
        %s1101 = scalar_lea.sflag [#allocation9], %s1100
        %s1102 = sand.u32 %s106, 1
        %s1103 = smul.addr %s1102, 2
        %s1104 = scalar_lea.vmem [#allocation8], %s1103
        // Predicated region
        $region37: #{tpu_custom_call.1} parent=27 // pred_check
          %p1105 = pneg %p90
        $region38: #{tpu_custom_call.1} parent=27 // pred_check_branch
          %1107 = sbr.rel (%p1105) target = $region40
        $region39: #{tpu_custom_call.1} parent=27 // pred_region
          %s1108 = smul.u32 64, %s25
          %s1110 = ssub.s32 8192, 8192
          %1111 = vsyncadd %s1096, %s1110
          %s1112 = smul.addr %s1108, 128
          %s1113 = scalar_lea.hbm %s2, %s1112
          %s1114 = sshll.u32 %s1099, 4
          %s1115 = int_to_ptr.vmem [resolvable:$true] %s1114
          %1120 = dma.vmem_to_hbm [thread:$0]  %s1115, 8192, %s1113, %s1096, 128, 128, 8
        $region40: #{tpu_custom_call.1} parent=27 // pred_fallthru
          _
        // Predicated region
        $region41: #{tpu_custom_call.1} parent=27 // pred_check
          %p1121 = pneg %p116
        $region42: #{tpu_custom_call.1} parent=27 // pred_check_branch
          %1123 = sbr.rel (%p1121) target = $region44
        $region43: #{tpu_custom_call.1} parent=27 // pred_region
          %s1125 = ssub.s32 32, 32
          %1126 = vsyncadd %s1101, %s1125
          %s1127 = smul.addr %s25, 32
          %s1128 = scalar_lea.hbm %s3, %s1127
          %s1130 = sshll.u32 %s1104, 4
          %s1131 = int_to_ptr.vmem [resolvable:$true] %s1130
          %1133 = dma.vmem_to_hbm [thread:$0]  %s1131, 32, %s1128, %s1101
        $region44: #{tpu_custom_call.1} parent=27 // pred_fallthru
          _
      $region28: #{tpu_custom_call.1} parent=5 // pred_fallthru
        _
      %p1134 = scmp.le.s32.totalorder 2, %s20
      // Predicated region
      $region45: #{tpu_custom_call.1} parent=5 // pred_check
        %p1135 = pneg %p1134
      $region46: #{tpu_custom_call.1} parent=5 // pred_check_branch
        %1137 = sbr.rel (%p1135) target = $region48
      $region47: #{tpu_custom_call.1} parent=5 // pred_region
        %s1138 = ssub.s32 %s20, 2
        // Predicated region
        $region49: #{tpu_custom_call.1} parent=47 // pred_check
          %p1139 = pneg %p96
        $region50: #{tpu_custom_call.1} parent=47 // pred_check_branch
          %1141 = sbr.rel (%p1139) target = $region52
        $region51: #{tpu_custom_call.1} parent=47 // pred_region
          %s1142 = sand.u32 %s81, 1
          %s1143 = scalar_lea.sflag [#allocation4], %s1142
          %s1144 = sand.u32 %s81, 1
          %s1145 = smul.addr %s1144, 512
          %s1146 = scalar_lea.vmem [#allocation7], %s1145
          %1147 = dma.done %s1143, 8192
        $region52: #{tpu_custom_call.1} parent=47 // pred_fallthru
          _
        // Predicated region
        $region53: #{tpu_custom_call.1} parent=47 // pred_check
          %p1148 = pneg %p122
        $region54: #{tpu_custom_call.1} parent=47 // pred_check_branch
          %1150 = sbr.rel (%p1148) target = $region56
        $region55: #{tpu_custom_call.1} parent=47 // pred_region
          %s1151 = sand.u32 %s107, 1
          %s1152 = scalar_lea.sflag [#allocation9], %s1151
          %s1153 = sand.u32 %s107, 1
          %s1154 = smul.addr %s1153, 2
          %s1155 = scalar_lea.vmem [#allocation8], %s1154
          %1156 = dma.done %s1152, 32
        $region56: #{tpu_custom_call.1} parent=47 // pred_fallthru
          _
      $region48: #{tpu_custom_call.1} parent=5 // pred_fallthru
        _
    $region6: #{tpu_custom_call.1} parent=1 // loop_footer
      %s24 = sadd.s32 1, %s20
    $region7: #{tpu_custom_call.1} parent=1 // loop_footer_branch
      %19 = sbr.rel target = $region3
    $region8: #{tpu_custom_call.1} parent=1 // loop_exit
      _
    %1157 = vsyncpa [#allocation3], 1
    %s1158 = scalar_lea.sflag [#allocation3], 1
    %1159 = vsyncpa %s1158, 1
    %1160 = vsyncpa [#allocation6], 1
    %1161 = vsyncpa [#allocation4], 1
    %s1162 = scalar_lea.sflag [#allocation4], 1
    %1163 = vsyncpa %s1162, 1
    %1164 = vsyncpa [#allocation9], 1
    %s1165 = scalar_lea.sflag [#allocation9], 1
    %1166 = vsyncpa %s1165, 1

</llo_original>
